<compile_context>
chip_gen: v5e
topology: v5e:2x2
jax: 0.10.0
libtpu: 0.0.40
codegen_flags: <defaults>
</compile_context>

<pallas_src>
import math

import numpy as np

import jax
import jax.numpy as jnp
from jax import lax
from jax.experimental import pallas as pl
from jax.experimental.pallas import tpu as pltpu


# ----------------------------- scalar glue (host-side) -----------------------------

def compute_pad_size(kernel_size, dilation, stride, pad_type):
    ks = 1 + dilation * (kernel_size - 1)
    if pad_type is None:
        return (0, 0)
    if pad_type == 'front':
        return (max(ks - stride, 0), min(stride - 1, ks - 1))
    if pad_type == 'both':
        return (max(ks - stride, 0) // 2,
                min(stride - 1, ks - 1) + math.ceil(max(ks - stride, 0) / 2))
    if pad_type == 'end':
        return (0, ks - 1)
    raise ValueError(pad_type)


def _compute_transpose_out_size(in_size, kernel_size, dilation, stride, pad_type):
    stride = kernel_size if stride is None else stride
    out_size = 1 + (np.asarray(in_size) - 1) * stride + dilation * (kernel_size - 1)
    front_pad, end_pad = compute_pad_size(kernel_size, dilation, stride, pad_type)
    end_pad = max(end_pad - stride + 1, 0)
    return out_size.astype(np.int64) - front_pad - end_pad


def _round_up(x, m):
    return ((x + m - 1) // m) * m


def _choose_tile_m(M, per_row_bytes, budget=4 * 1024 * 1024, cap=512):
    """Row-tile: multiple of 8, <= cap, and block bytes within a VMEM budget.
    Never falls back to a whole-array block; ragged last row block is fine
    (rows never mix in any of the dots / selects below)."""
    tm = min(cap, _round_up(max(M, 1), 8))
    tm = max(8, (tm // 8) * 8)
    while tm > 8 and tm * per_row_bytes > budget:
        tm = max(8, ((tm // 2) // 8) * 8)
    return tm


def _grid_and_maps(grid_m, grid_t):
    """Order the 2-D grid so the larger axis is the leading 'parallel' axis
    (keeps both TensorCores busy on v7x even when one extent is 1)."""
    if grid_m >= grid_t:
        def mk(fn):
            return lambda m, t: fn(m, t)
        return (grid_m, grid_t), mk, 1       # time axis is grid axis 1
    def mk(fn):
        return lambda t, m: fn(m, t)
    return (grid_t, grid_m), mk, 0           # time axis is grid axis 0


# ----------------------------- Pallas kernels -----------------------------

def _make_upsample_kernel(stride, tile_t, chunk):
    """Nearest upsample: per 128-column chunk of x, one (tile_m,128)x(128,128*stride)
    matmul against a block-diagonal repeat block built in-kernel from iota."""
    n_chunks = tile_t // chunk

    def kernel(x_ref, o_ref):
        row = lax.broadcasted_iota(jnp.int32, (chunk, chunk * stride), 0)
        col = lax.broadcasted_iota(jnp.int32, (chunk, chunk * stride), 1)
        diff = col - row * stride
        r = jnp.where((diff >= 0) & (diff < stride), 1.0, 0.0)      # (chunk, chunk*stride) f32
        for c in range(n_chunks):
            xc = x_ref[:, c * chunk:(c + 1) * chunk].astype(jnp.float32)
            o_ref[:, c * chunk * stride:(c + 1) * chunk * stride] = jnp.dot(
                xc, r, preferred_element_type=jnp.float32).astype(o_ref.dtype)

    return kernel


def _make_unpool_kernel(stride, pool_size, front_pad, halo_l, halo_r,
                        tile_m, tile_to, time_axis):
    """MaxUnpool scatter with the front_pad trim fused in.

    Main input tile -> pool_size small dots (K=128 contraction each) against
    in-kernel-built one-hot spread patterns covering the full (tile_m, tile_to)
    output block.  Halo copies (previous / next 128-wide input tile) only touch
    the first / last 128 output columns with only the offsets d that can spill."""
    K = halo_l + 1 + halo_r
    ti = 128

    def kernel(*refs):
        x_refs = refs[0:K]
        idx_refs = refs[K:2 * K]
        o_ref = refs[2 * K]

        o = pl.program_id(time_axis)

        # Hoisted iotas (shared by every copy / offset).
        t_str = lax.broadcasted_iota(jnp.int32, (tile_m, ti), 1) * stride
        row = lax.broadcasted_iota(jnp.int32, (ti, tile_to), 0)
        col = lax.broadcasted_iota(jnp.int32, (ti, tile_to), 1)
        cmr = col - row * stride                      # jj - t_loc*stride
        if halo_l or halo_r:
            row_h = lax.broadcasted_iota(jnp.int32, (ti, ti), 0)
            col_h = lax.broadcasted_iota(jnp.int32, (ti, ti), 1)
            cmr_h = col_h - row_h * stride

        def rel_for(k):
            # idx minus the start of its pooling window (valid scatter -> [0, pool))
            base = (o + (k - halo_l)) * tile_to       # = input_tile_index * 128 * stride
            return idx_refs[k][...] - t_str - base

        # ---- main copy (input tile i == o) -> full output block ----
        km = halo_l
        x_m = x_refs[km][...]
        rel_m = rel_for(km)
        acc = None
        for d in range(pool_size):
            s_d = jnp.where(cmr == (d - front_pad), 1.0, 0.0)
            y = jnp.where(rel_m == d, x_m, 0).astype(jnp.float32)
            part = jnp.dot(y, s_d, preferred_element_type=jnp.float32)
            acc = part if acc is None else acc + part
        o_ref[...] = acc.astype(o_ref.dtype)

        # ---- left halo (input tile i == o-1) -> first 128 output columns only ----
        if halo_l:
            x_k = x_refs[0][...]
            rel_k = rel_for(0)
            accl = None
            for d in range(front_pad + stride, pool_size):
                s_d = jnp.where(cmr_h == (d - front_pad - ti * stride), 1.0, 0.0)
                y = jnp.where(rel_k == d, x_k, 0).astype(jnp.float32)
                part = jnp.dot(y, s_d, preferred_element_type=jnp.float32)
                accl = part if accl is None else accl + part
            if accl is not None:
                o_ref[:, 0:128] = o_ref[:, 0:128] + accl.astype(o_ref.dtype)

        # ---- right halo (input tile i == o+1) -> last 128 output columns only ----
        if halo_r:
            kr = K - 1
            x_k = x_refs[kr][...]
            rel_k = rel_for(kr)
            accr = None
            for d in range(0, front_pad):
                s_d = jnp.where(cmr_h == (d - front_pad + ti), 1.0, 0.0)
                y = jnp.where(rel_k == d, x_k, 0).astype(jnp.float32)
                part = jnp.dot(y, s_d, preferred_element_type=jnp.float32)
                accr = part if accr is None else accr + part
            if accr is not None:
                o_ref[:, tile_to - 128:tile_to] = (
                    o_ref[:, tile_to - 128:tile_to] + accr.astype(o_ref.dtype))

    return kernel


# ----------------------------- wrappers -----------------------------

def _unpool_interpolate(x, stride):
    B, C, T = x.shape
    M = B * C
    T_out = T * stride
    chunk = 128

    T128 = _round_up(T, chunk)
    x2 = x.reshape(M, T)
    if T128 != T:
        # Zero-pad so no garbage column ever shares a 128-chunk with valid data.
        x2 = jnp.pad(x2, ((0, 0), (0, T128 - T)))

    tile_t = max(chunk, min(512, (2048 // max(stride, 1)) // chunk * chunk))
    tile_t = max(chunk, min(tile_t, T128))
    grid_t = pl.cdiv(T128, tile_t)

    itemsize = jnp.dtype(x.dtype).itemsize
    per_row_bytes = tile_t * itemsize * (1 + stride)
    tile_m = _choose_tile_m(M, per_row_bytes)
    grid_m = pl.cdiv(M, tile_m)

    grid, mk, _ = _grid_and_maps(grid_m, grid_t)
    kernel = _make_upsample_kernel(stride, tile_t, chunk)

    out = pl.pallas_call(
        kernel,
        out_shape=jax.ShapeDtypeStruct((M, T_out), x.dtype),
        grid_spec=pltpu.PrefetchScalarGridSpec(
            num_scalar_prefetch=0,
            grid=grid,
            in_specs=[pl.BlockSpec((tile_m, tile_t), mk(lambda m, t: (m, t)))],
            out_specs=pl.BlockSpec((tile_m, tile_t * stride), mk(lambda m, t: (m, t))),
        ),
        compiler_params=pltpu.CompilerParams(
            dimension_semantics=("parallel", "parallel"),
            vmem_limit_bytes=32 * 1024 * 1024),
    )(x2)
    return out.reshape(B, C, T_out)


def _unpool_with_indices(x, indices, pool_size, stride, pad_type):
    B, C, T_in = x.shape
    M = B * C
    assert pool_size <= 128, "pool_size > 128 not supported by this kernel"

    front_pad, end_pad = compute_pad_size(pool_size, 1, stride, pad_type)
    end_pad = max(end_pad - stride + 1, 0)
    T_full = (T_in - 1) * stride + pool_size
    T_trim = T_full - front_pad - end_pad

    tile_ti = 128
    tile_to = tile_ti * stride
    halo_l = 1 if pool_size > stride + front_pad else 0
    halo_r = 1 if front_pad > 0 else 0
    K = halo_l + 1 + halo_r

    n_o = pl.cdiv(T_trim, tile_to)              # output time tiles (last one masked)
    W_in = (n_o + K - 1) * tile_ti              # padded input width for shifted copies
    left = halo_l * tile_ti
    right = W_in - left - T_in
    if right < 0:                               # defensive; should not trigger
        W_in = _round_up(left + T_in, tile_ti)
        right = W_in - left - T_in

    # Dead padding (x = 0 -> contributes nothing; idx value irrelevant there).
    x2 = jnp.pad(x.reshape(M, T_in), ((0, 0), (left, right)))
    idx2 = jnp.pad(indices.reshape(M, T_in).astype(jnp.int32), ((0, 0), (left, right)))

    itemsize = jnp.dtype(x.dtype).itemsize
    per_row_bytes = K * tile_ti * (itemsize + 4) + tile_to * itemsize
    tile_m = _choose_tile_m(M, per_row_bytes)
    grid_m = pl.cdiv(M, tile_m)

    grid, mk, time_axis = _grid_and_maps(grid_m, n_o)
    kernel = _make_unpool_kernel(stride, pool_size, front_pad, halo_l, halo_r,
                                 tile_m, tile_to, time_axis)

    def shifted(k):
        return mk(lambda m, o, kk=k: (m, o + kk))

    in_specs = ([pl.BlockSpec((tile_m, tile_ti), shifted(k)) for k in range(K)]
                + [pl.BlockSpec((tile_m, tile_ti), shifted(k)) for k in range(K)])

    out = pl.pallas_call(
        kernel,
        out_shape=jax.ShapeDtypeStruct((M, T_trim), x.dtype),
        grid_spec=pltpu.PrefetchScalarGridSpec(
            num_scalar_prefetch=0,
            grid=grid,
            in_specs=in_specs,
            out_specs=pl.BlockSpec((tile_m, tile_to), mk(lambda m, o: (m, o))),
        ),
        compiler_params=pltpu.CompilerParams(
            dimension_semantics=("parallel", "parallel"),
            vmem_limit_bytes=32 * 1024 * 1024),
    )(*([x2] * K + [idx2] * K))

    return out.reshape(B, C, T_trim)


class Unpool1d:
    """1d MaxUnpooling if indices are provided else upsampling (JAX/Pallas)."""

    def __init__(self, pool_size, stride=None, pad_type=None):
        assert np.isscalar(pool_size)
        assert pad_type is None or np.isscalar(pad_type)
        self.pool_size = pool_size
        self.stride = pool_size if stride is None else stride
        self.pad_type = pad_type

    def __call__(self, x, sequence_lengths=None, indices=None):
        if self.pool_size < 2:
            return x, sequence_lengths
        if indices is None:
            x = _unpool_interpolate(x, self.stride)
        else:
            x = _unpool_with_indices(
                x, indices, self.pool_size, self.stride, self.pad_type)
        if sequence_lengths is not None:
            sequence_lengths = _compute_transpose_out_size(
                sequence_lengths, self.pool_size, 1, self.stride, self.pad_type)
        return x, sequence_lengths


# ----------------------------- demo / check -----------------------------

def _ref_maxunpool(x, indices, pool_size, stride, pad_type):
    B, C, T = x.shape
    T_full = (T - 1) * stride + pool_size
    full = jnp.zeros((B, C, T_full), x.dtype)
    bi, ci, _ = jnp.meshgrid(jnp.arange(B), jnp.arange(C), jnp.arange(T), indexing='ij')
    full = full.at[bi, ci, indices].set(x)
    fp, ep = compute_pad_size(pool_size, 1, stride, pad_type)
    ep = max(ep - stride + 1, 0)
    return full[..., fp:T_full - ep] if ep > 0 else full[..., fp:]


if __name__ == "__main__":
    key = jax.random.PRNGKey(0)
    B, C, T = 2, 4, 8
    k1, k2, k3, k4 = jax.random.split(key, 4)
    x = jax.random.normal(k1, (B, C, T), dtype=jnp.float32)
    seq_lens = np.array([8, 6], dtype=np.int64)

    # --- path 1: upsampling (indices=None), pool_size = stride = 2 ---
    unpool = Unpool1d(pool_size=2)
    y1, sl1 = unpool(x, sequence_lengths=seq_lens)
    y1 = jax.block_until_ready(y1)
    ref1 = jnp.repeat(x, 2, axis=-1)
    assert y1.shape == (B, C, T * 2), y1.shape
    np.testing.assert_allclose(np.asarray(y1), np.asarray(ref1), rtol=1e-6, atol=1e-6)

    # --- path 2: max-unpool with indices, pool_size=3, stride=2, pad_type='front' ---
    pool_size, stride, pad_type = 3, 2, 'front'
    offsets = jax.random.randint(k2, (B, C, T), 0, stride)
    base = (jnp.arange(T, dtype=jnp.int32) * stride)[None, None, :]
    indices = (base + offsets).astype(jnp.int32)
    unpool2 = Unpool1d(pool_size=pool_size, stride=stride, pad_type=pad_type)
    y2, sl2 = unpool2(x, sequence_lengths=seq_lens, indices=indices)
    y2 = jax.block_until_ready(y2)
    ref2 = _ref_maxunpool(x, indices, pool_size, stride, pad_type)
    assert y2.shape == ref2.shape, (y2.shape, ref2.shape)
    np.testing.assert_allclose(np.asarray(y2), np.asarray(ref2), rtol=1e-6, atol=1e-6)
    assert sl2.dtype == np.int64

    # --- path 3: exercises the left-halo (pool>stride, pad_type=None, T crosses a tile) ---
    T3, pool3, stride3 = 200, 3, 2
    x3 = jax.random.normal(k3, (B, C, T3), dtype=jnp.float32)
    t3 = jnp.arange(T3, dtype=jnp.int32)
    off3 = jnp.where(t3 % 2 == 1, 2, 1)                      # collision-free, uses d=2
    idx3 = (t3 * stride3 + off3)[None, None, :] * jnp.ones((B, C, 1), jnp.int32)
    y3, _ = Unpool1d(pool3, stride3, None)(x3, indices=idx3)
    y3 = jax.block_until_ready(y3)
    ref3 = _ref_maxunpool(x3, idx3, pool3, stride3, None)
    assert y3.shape == ref3.shape, (y3.shape, ref3.shape)
    np.testing.assert_allclose(np.asarray(y3), np.asarray(ref3), rtol=1e-6, atol=1e-6)

    # --- path 4: exercises both halos (pad_type='both', pool=4, stride=2) ---
    T4, pool4, stride4 = 150, 4, 2
    x4 = jax.random.normal(k4, (B, C, T4), dtype=jnp.float32)
    t4 = jnp.arange(T4, dtype=jnp.int32)
    off4 = jnp.where(t4 % 2 == 1, 3, 0)                      # collision-free, uses d=0 and d=3
    idx4 = (t4 * stride4 + off4)[None, None, :] * jnp.ones((B, C, 1), jnp.int32)
    y4, _ = Unpool1d(pool4, stride4, 'both')(x4, indices=idx4)
    y4 = jax.block_until_ready(y4)
    ref4 = _ref_maxunpool(x4, idx4, pool4, stride4, 'both')
    assert y4.shape == ref4.shape, (y4.shape, ref4.shape)
    np.testing.assert_allclose(np.asarray(y4), np.asarray(ref4), rtol=1e-6, atol=1e-6)

    print("KERNEL_OK")
</pallas_src>

<mosaic_0001>
module attributes {stable_mosaic.version = 11 : i64} {
  func.func @kernel(%arg0: i32, %arg1: i32, %arg2: memref<8x128xf32, #tpu.memory_space<vmem>>, %arg3: memref<8x256xf32, #tpu.memory_space<vmem>>) attributes {dimension_semantics = [#tpu.dimension_semantics<parallel>, #tpu.dimension_semantics<parallel>], iteration_bounds = array<i64: 1, 1>, scalar_prefetch = 0 : i64, scratch_operands = 0 : i64, tpu.core_type = #tpu.core_type<tc>, window_params = [{transform_indices = @transform_0, window_bounds = array<i64: 8, 128>}, {transform_indices = @transform_1, window_bounds = array<i64: 8, 256>}]} {
    %0 = tpu.iota {dimensions = array<i32: 0>} : vector<128x256xi32>
    %1 = tpu.iota {dimensions = array<i32: 1>} : vector<128x256xi32>
    %c2_i32 = arith.constant 2 : i32
    %2 = vector.broadcast %c2_i32 : i32 to vector<128x256xi32>
    %3 = arith.muli %0, %2 : vector<128x256xi32>
    %4 = arith.subi %1, %3 : vector<128x256xi32>
    %c0_i32 = arith.constant 0 : i32
    %5 = vector.broadcast %c0_i32 : i32 to vector<128x256xi32>
    %6 = arith.cmpi sge, %4, %5 : vector<128x256xi32>
    %c2_i32_0 = arith.constant 2 : i32
    %7 = vector.broadcast %c2_i32_0 : i32 to vector<128x256xi32>
    %8 = arith.cmpi slt, %4, %7 : vector<128x256xi32>
    %9 = arith.andi %6, %8 : vector<128x256xi1>
    %cst = arith.constant 1.000000e+00 : f32
    %cst_1 = arith.constant 0.000000e+00 : f32
    %10 = vector.broadcast %cst : f32 to vector<128x256xf32>
    %11 = vector.broadcast %cst_1 : f32 to vector<128x256xf32>
    %12 = arith.select %9, %10, %11 : vector<128x256xi1>, vector<128x256xf32>
    %c0 = arith.constant 0 : index
    %c0_2 = arith.constant 0 : index
    %13 = vector.load %arg2[%c0, %c0_2] : memref<8x128xf32, #tpu.memory_space<vmem>>, vector<8x128xf32>
    %cst_3 = arith.constant dense<0.000000e+00> : vector<8x256xf32>
    %14 = tpu.matmul %13, %12, %cst_3 {dimension_numbers = #tpu.dot_dimension_numbers<[1], [0], [0], [1], [0, 0, 1, 1], [], []>} : vector<8x128xf32>, vector<128x256xf32>, vector<8x256xf32> -> vector<8x256xf32>
    %c0_4 = arith.constant 0 : index
    %c0_5 = arith.constant 0 : index
    %15 = vector.load %arg3[%c0_4, %c0_5] : memref<8x256xf32, #tpu.memory_space<vmem>>, vector<8x256xf32>
    tpu.vector_store %arg3[%c0_4, %c0_5], %14 {strides = array<i32>} : memref<8x256xf32, #tpu.memory_space<vmem>>, vector<8x256xf32>,
    return
  }
  func.func @transform_0(%arg0: i32, %arg1: i32) -> (i32, i32) {
    %c0_i32 = arith.constant 0 : i32
    return %arg0, %arg1 : i32, i32
  }
  func.func @transform_1(%arg0: i32, %arg1: i32) -> (i32, i32) {
    %c0_i32 = arith.constant 0 : i32
    return %arg0, %arg1 : i32, i32
  }
}

</mosaic_0001>

<llo_original>
// kernel: tpu_custom_call.1
$region0: #{tpu_custom_call.1}
  #allocation0 [shape = 'u32[]', space=smem, size = 0x4, offset = 0x4, fixed_abs, tag = 'smem constant byte address 0x4 - core index']
  #allocation1 [shape = 'u32[72,128]{1,0:T(1,128)}', space=vmem, size = 0x9000, scoped, tag = 'internal scratch']
  %s0 = inlined_call_operand.hbm [shape: f32[8,128], index: 0, kind: input, shape index: {}]
  %s1 = inlined_call_operand.hbm [shape: f32[8,16], index: 1, kind: output, shape index: {}]
  %s2 = sld [smem:[#allocation0]]
  $region18: #{tpu_custom_call.1} parent=0
    _
  %s4 = ssub.s32 1, %s2
  %s5 = scalar_select 0, %s4, %s2
  $region1: #{tpu_custom_call.1} parent=0
    #allocation2 [shape = 'u8[4096]{0}', space=vmem, size = 0x1000, scoped, tag = 'input window, operand 0, single buffered']
    #allocation3 [shape = 's32[1]{0}', space=sflag, size = 0x4, scoped, tag = 'scoped memory for tpu_custom_call.1']
    #allocation4 [shape = 's32[1]{0}', space=sflag, size = 0x4, scoped, tag = 'scoped memory for tpu_custom_call.1']
    #allocation5 [shape = 'u8[8192]{0}', space=vmem, size = 0x2000, scoped, tag = 'output window, operand 0, single buffered']
    %6 = vsyncpa [#allocation3], 0
    %7 = vsyncpa [#allocation4], 0
    // Predicated region
    $region2: #{tpu_custom_call.1} parent=1 // pred_check
      _
    $region3: #{tpu_custom_call.1} parent=1 // pred_check_branch
      %9 = sbr.rel (0) target = $region5
    $region4: #{tpu_custom_call.1} parent=1 // pred_region
      %11 = vsyncadd [#allocation3], 0
      %s13 = sshll.u32 %s0, 4
      %s14 = int_to_ptr.hbm [resolvable:$true] %s13
      %s15 = sshll.u32 [#allocation2], 4
      %s16 = int_to_ptr.vmem [resolvable:$true] %s15
      %18 = dma.hbm_to_vmem [thread:$0]  %s14, 128, %s16, [#allocation3]
    $region5: #{tpu_custom_call.1} parent=1 // pred_fallthru
      _
    // Predicated region
    $region6: #{tpu_custom_call.1} parent=1 // pred_check
      _
    $region7: #{tpu_custom_call.1} parent=1 // pred_check_branch
      %20 = sbr.rel (0) target = $region9
    $region8: #{tpu_custom_call.1} parent=1 // pred_region
      %22 = dma.done [#allocation3], 128
    $region9: #{tpu_custom_call.1} parent=1 // pred_fallthru
      _
    %v23 = vlaneseq
    %v24 = vshrl.u32 %v23, 7
    %v25 = vadd.s32 %v24, 8
    %v26 = vadd.s32 %v24, 16
    %v27 = vadd.s32 %v24, 24
    %v28 = vadd.s32 %v24, 32
    %v29 = vadd.s32 %v24, 40
    %v30 = vadd.s32 %v24, 48
    %v31 = vadd.s32 %v24, 56
    %v32 = vadd.s32 %v24, 64
    %v33 = vadd.s32 %v24, 72
    %v34 = vadd.s32 %v24, 80
    %v35 = vadd.s32 %v24, 88
    %v36 = vadd.s32 %v24, 96
    %v37 = vadd.s32 %v24, 104
    %v38 = vadd.s32 %v24, 112
    %v39 = vadd.s32 %v24, 120
    %v40 = vlaneseq
    %v41 = vand.u32 %v40, 127
    %v42 = vadd.s32 %v41, 128
    %v43 = vmul.u32 %v24, 2
    %v44 = vmul.u32 %v25, 2
    %v45 = vmul.u32 %v26, 2
    %v46 = vmul.u32 %v27, 2
    %v47 = vmul.u32 %v28, 2
    %v48 = vmul.u32 %v29, 2
    %v49 = vmul.u32 %v30, 2
    %v50 = vmul.u32 %v31, 2
    %v51 = vmul.u32 %v32, 2
    %v52 = vmul.u32 %v33, 2
    %v53 = vmul.u32 %v34, 2
    %v54 = vmul.u32 %v35, 2
    %v55 = vmul.u32 %v36, 2
    %v56 = vmul.u32 %v37, 2
    %v57 = vmul.u32 %v38, 2
    %v58 = vmul.u32 %v39, 2
    %v59 = vsub.s32 %v41, %v43
    %v60 = vsub.s32 %v42, %v43
    %v61 = vsub.s32 %v41, %v44
    %v62 = vsub.s32 %v42, %v44
    %v63 = vsub.s32 %v41, %v45
    %v64 = vsub.s32 %v42, %v45
    %v65 = vsub.s32 %v41, %v46
    %v66 = vsub.s32 %v42, %v46
    %v67 = vsub.s32 %v41, %v47
    %v68 = vsub.s32 %v42, %v47
    %v69 = vsub.s32 %v41, %v48
    %v70 = vsub.s32 %v42, %v48
    %v71 = vsub.s32 %v41, %v49
    %v72 = vsub.s32 %v42, %v49
    %v73 = vsub.s32 %v41, %v50
    %v74 = vsub.s32 %v42, %v50
    %v75 = vsub.s32 %v41, %v51
    %v76 = vsub.s32 %v42, %v51
    %v77 = vsub.s32 %v41, %v52
    %v78 = vsub.s32 %v42, %v52
    %v79 = vsub.s32 %v41, %v53
    %v80 = vsub.s32 %v42, %v53
    %v81 = vsub.s32 %v41, %v54
    %v82 = vsub.s32 %v42, %v54
    %v83 = vsub.s32 %v41, %v55
    %v84 = vsub.s32 %v42, %v55
    %v85 = vsub.s32 %v41, %v56
    %v86 = vsub.s32 %v42, %v56
    %v87 = vsub.s32 %v41, %v57
    %v88 = vsub.s32 %v42, %v57
    %v89 = vsub.s32 %v41, %v58
    %v90 = vsub.s32 %v42, %v58
    %vm91 = vcmp.ge.s32.totalorder %v59, 0
    %vm92 = vcmp.ge.s32.totalorder %v60, 0
    %vm93 = vcmp.ge.s32.totalorder %v61, 0
    %vm94 = vcmp.ge.s32.totalorder %v62, 0
    %vm95 = vcmp.ge.s32.totalorder %v63, 0
    %vm96 = vcmp.ge.s32.totalorder %v64, 0
    %vm97 = vcmp.ge.s32.totalorder %v65, 0
    %vm98 = vcmp.ge.s32.totalorder %v66, 0
    %vm99 = vcmp.ge.s32.totalorder %v67, 0
    %vm100 = vcmp.ge.s32.totalorder %v68, 0
    %vm101 = vcmp.ge.s32.totalorder %v69, 0
    %vm102 = vcmp.ge.s32.totalorder %v70, 0
    %vm103 = vcmp.ge.s32.totalorder %v71, 0
    %vm104 = vcmp.ge.s32.totalorder %v72, 0
    %vm105 = vcmp.ge.s32.totalorder %v73, 0
    %vm106 = vcmp.ge.s32.totalorder %v74, 0
    %vm107 = vcmp.ge.s32.totalorder %v75, 0
    %vm108 = vcmp.ge.s32.totalorder %v76, 0
    %vm109 = vcmp.ge.s32.totalorder %v77, 0
    %vm110 = vcmp.ge.s32.totalorder %v78, 0
    %vm111 = vcmp.ge.s32.totalorder %v79, 0
    %vm112 = vcmp.ge.s32.totalorder %v80, 0
    %vm113 = vcmp.ge.s32.totalorder %v81, 0
    %vm114 = vcmp.ge.s32.totalorder %v82, 0
    %vm115 = vcmp.ge.s32.totalorder %v83, 0
    %vm116 = vcmp.ge.s32.totalorder %v84, 0
    %vm117 = vcmp.ge.s32.totalorder %v85, 0
    %vm118 = vcmp.ge.s32.totalorder %v86, 0
    %vm119 = vcmp.ge.s32.totalorder %v87, 0
    %vm120 = vcmp.ge.s32.totalorder %v88, 0
    %vm121 = vcmp.ge.s32.totalorder %v89, 0
    %vm122 = vcmp.ge.s32.totalorder %v90, 0
    %vm123 = vcmp.lt.s32.totalorder %v59, 2
    %vm124 = vcmp.lt.s32.totalorder %v60, 2
    %vm125 = vcmp.lt.s32.totalorder %v61, 2
    %vm126 = vcmp.lt.s32.totalorder %v62, 2
    %vm127 = vcmp.lt.s32.totalorder %v63, 2
    %vm128 = vcmp.lt.s32.totalorder %v64, 2
    %vm129 = vcmp.lt.s32.totalorder %v65, 2
    %vm130 = vcmp.lt.s32.totalorder %v66, 2
    %vm131 = vcmp.lt.s32.totalorder %v67, 2
    %vm132 = vcmp.lt.s32.totalorder %v68, 2
    %vm133 = vcmp.lt.s32.totalorder %v69, 2
    %vm134 = vcmp.lt.s32.totalorder %v70, 2
    %vm135 = vcmp.lt.s32.totalorder %v71, 2
    %vm136 = vcmp.lt.s32.totalorder %v72, 2
    %vm137 = vcmp.lt.s32.totalorder %v73, 2
    %vm138 = vcmp.lt.s32.totalorder %v74, 2
    %vm139 = vcmp.lt.s32.totalorder %v75, 2
    %vm140 = vcmp.lt.s32.totalorder %v76, 2
    %vm141 = vcmp.lt.s32.totalorder %v77, 2
    %vm142 = vcmp.lt.s32.totalorder %v78, 2
    %vm143 = vcmp.lt.s32.totalorder %v79, 2
    %vm144 = vcmp.lt.s32.totalorder %v80, 2
    %vm145 = vcmp.lt.s32.totalorder %v81, 2
    %vm146 = vcmp.lt.s32.totalorder %v82, 2
    %vm147 = vcmp.lt.s32.totalorder %v83, 2
    %vm148 = vcmp.lt.s32.totalorder %v84, 2
    %vm149 = vcmp.lt.s32.totalorder %v85, 2
    %vm150 = vcmp.lt.s32.totalorder %v86, 2
    %vm151 = vcmp.lt.s32.totalorder %v87, 2
    %vm152 = vcmp.lt.s32.totalorder %v88, 2
    %vm153 = vcmp.lt.s32.totalorder %v89, 2
    %vm154 = vcmp.lt.s32.totalorder %v90, 2
    %vm155 = vmand %vm91, %vm123
    %vm156 = vmand %vm92, %vm124
    %vm157 = vmand %vm93, %vm125
    %vm158 = vmand %vm94, %vm126
    %vm159 = vmand %vm95, %vm127
    %vm160 = vmand %vm96, %vm128
    %vm161 = vmand %vm97, %vm129
    %vm162 = vmand %vm98, %vm130
    %vm163 = vmand %vm99, %vm131
    %vm164 = vmand %vm100, %vm132
    %vm165 = vmand %vm101, %vm133
    %vm166 = vmand %vm102, %vm134
    %vm167 = vmand %vm103, %vm135
    %vm168 = vmand %vm104, %vm136
    %vm169 = vmand %vm105, %vm137
    %vm170 = vmand %vm106, %vm138
    %vm171 = vmand %vm107, %vm139
    %vm172 = vmand %vm108, %vm140
    %vm173 = vmand %vm109, %vm141
    %vm174 = vmand %vm110, %vm142
    %vm175 = vmand %vm111, %vm143
    %vm176 = vmand %vm112, %vm144
    %vm177 = vmand %vm113, %vm145
    %vm178 = vmand %vm114, %vm146
    %vm179 = vmand %vm115, %vm147
    %vm180 = vmand %vm116, %vm148
    %vm181 = vmand %vm117, %vm149
    %vm182 = vmand %vm118, %vm150
    %vm183 = vmand %vm119, %vm151
    %vm184 = vmand %vm120, %vm152
    %vm185 = vmand %vm121, %vm153
    %vm186 = vmand %vm122, %vm154
    %v187 = vsel %vm155, 1.0, 0.0
    %v188 = vsel %vm156, 1.0, 0.0
    %v189 = vsel %vm157, 1.0, 0.0
    %v190 = vsel %vm158, 1.0, 0.0
    %v191 = vsel %vm159, 1.0, 0.0
    %v192 = vsel %vm160, 1.0, 0.0
    %v193 = vsel %vm161, 1.0, 0.0
    %v194 = vsel %vm162, 1.0, 0.0
    %v195 = vsel %vm163, 1.0, 0.0
    %v196 = vsel %vm164, 1.0, 0.0
    %v197 = vsel %vm165, 1.0, 0.0
    %v198 = vsel %vm166, 1.0, 0.0
    %v199 = vsel %vm167, 1.0, 0.0
    %v200 = vsel %vm168, 1.0, 0.0
    %v201 = vsel %vm169, 1.0, 0.0
    %v202 = vsel %vm170, 1.0, 0.0
    %v203 = vsel %vm171, 1.0, 0.0
    %v204 = vsel %vm172, 1.0, 0.0
    %v205 = vsel %vm173, 1.0, 0.0
    %v206 = vsel %vm174, 1.0, 0.0
    %v207 = vsel %vm175, 1.0, 0.0
    %v208 = vsel %vm176, 1.0, 0.0
    %v209 = vsel %vm177, 1.0, 0.0
    %v210 = vsel %vm178, 1.0, 0.0
    %v211 = vsel %vm179, 1.0, 0.0
    %v212 = vsel %vm180, 1.0, 0.0
    %v213 = vsel %vm181, 1.0, 0.0
    %v214 = vsel %vm182, 1.0, 0.0
    %v215 = vsel %vm183, 1.0, 0.0
    %v216 = vsel %vm184, 1.0, 0.0
    %v217 = vsel %vm185, 1.0, 0.0
    %v218 = vsel %vm186, 1.0, 0.0
    %v219 = vld [vmem:[#allocation2] sm:$0xff]
    %220 = vmatpush.msra.mxu0 %v217
    %221 = vmatpush.msra.mxu0 %v215
    %222 = vmatpush.msra.mxu0 %v213
    %223 = vmatpush.msra.mxu0 %v211
    %224 = vmatpush.msra.mxu0 %v209
    %225 = vmatpush.msra.mxu0 %v207
    %226 = vmatpush.msra.mxu0 %v205
    %227 = vmatpush.msra.mxu0 %v203
    %228 = vmatpush.msra.mxu0 %v201
    %229 = vmatpush.msra.mxu0 %v199
    %230 = vmatpush.msra.mxu0 %v197
    %231 = vmatpush.msra.mxu0 %v195
    %232 = vmatpush.msra.mxu0 %v193
    %233 = vmatpush.msra.mxu0 %v191
    %234 = vmatpush.msra.mxu0 %v189
    %235 = vmatpush.msra.mxu0 %v187
    %236 = vmatmul.f32.gmra.mxu0 %v219
    %v237 = vpop.f32.mrf.mxu0
    %v238 = vadd.f32 0.0, %v237
    %239 = vdwg.mxu0
    %240 = vmatpush.msra.mxu0 %v218
    %241 = vmatpush.msra.mxu0 %v216
    %242 = vmatpush.msra.mxu0 %v214
    %243 = vmatpush.msra.mxu0 %v212
    %244 = vmatpush.msra.mxu0 %v210
    %245 = vmatpush.msra.mxu0 %v208
    %246 = vmatpush.msra.mxu0 %v206
    %247 = vmatpush.msra.mxu0 %v204
    %248 = vmatpush.msra.mxu0 %v202
    %249 = vmatpush.msra.mxu0 %v200
    %250 = vmatpush.msra.mxu0 %v198
    %251 = vmatpush.msra.mxu0 %v196
    %252 = vmatpush.msra.mxu0 %v194
    %253 = vmatpush.msra.mxu0 %v192
    %254 = vmatpush.msra.mxu0 %v190
    %255 = vmatpush.msra.mxu0 %v188
    %256 = vmatmul.f32.gmra.mxu0 %v219
    %v257 = vpop.f32.mrf.mxu0
    %v258 = vadd.f32 0.0, %v257
    %259 = vdwg.mxu0
    %260 = vst [vmem:[#allocation5] sm:$0xff] %v238
    %261 = vst [vmem:[#allocation5 + $0x8] sm:$0xff] %v258
    // Predicated region
    $region10: #{tpu_custom_call.1} parent=1 // pred_check
      _
    $region11: #{tpu_custom_call.1} parent=1 // pred_check_branch
      %263 = sbr.rel (0) target = $region13
    $region12: #{tpu_custom_call.1} parent=1 // pred_region
      %265 = vsyncadd [#allocation4], 128
      %s267 = sshll.u32 [#allocation5], 4
      %s268 = int_to_ptr.vmem [resolvable:$true] %s267
      %s269 = sshll.u32 %s1, 4
      %s270 = int_to_ptr.hbm [resolvable:$true] %s269
      %272 = dma.vmem_to_hbm [thread:$0]  %s268, 128, %s270, [#allocation4]
    $region13: #{tpu_custom_call.1} parent=1 // pred_fallthru
      _
    // Predicated region
    $region14: #{tpu_custom_call.1} parent=1 // pred_check
      _
    $region15: #{tpu_custom_call.1} parent=1 // pred_check_branch
      %274 = sbr.rel (0) target = $region17
    $region16: #{tpu_custom_call.1} parent=1 // pred_region
      %276 = dma.done [#allocation4], 256
    $region17: #{tpu_custom_call.1} parent=1 // pred_fallthru
      _
    %277 = vsyncpa [#allocation3], 1
    %278 = vsyncpa [#allocation4], 1

</llo_original>
